<compile_context>
chip_gen: v5e
topology: v5e:2x2
jax: 0.10.0
libtpu: 0.0.40
codegen_flags: <defaults>
</compile_context>

<pallas_src>
import jax
import jax.numpy as jnp
from jax.experimental import pallas as pl
from jax.experimental.pallas import tpu as pltpu

OBS_DIM = 60
HID = 256
ACT_DIM = 8

OBS_PAD = 64     # layer-1 contraction dim padded to a sublane multiple
OUT_PAD = 128    # layer-3 output padded to a full lane width (dense stores)


def _actor_mlp_kernel(obs_ref, w1_ref, b1_ref, w2_ref, b2_ref, w3_ref, b3_ref,
                      out_ref):
    # Layer 1: (TB, 64)bf16 @ (64, 256)bf16 -> f32, + bias, ReLU
    h1 = jnp.dot(obs_ref[...], w1_ref[...], preferred_element_type=jnp.float32)
    h1 = jnp.maximum(h1 + b1_ref[...], 0.0).astype(jnp.bfloat16)

    # Layer 2: (TB, 256)bf16 @ (256, 256)bf16 -> f32, + bias, ReLU
    h2 = jnp.dot(h1, w2_ref[...], preferred_element_type=jnp.float32)
    h2 = jnp.maximum(h2 + b2_ref[...], 0.0).astype(jnp.bfloat16)

    # Layer 3: (TB, 256)bf16 @ (256, 128)bf16 -> f32, + bias (lane-dense out)
    out = jnp.dot(h2, w3_ref[...], preferred_element_type=jnp.float32)
    out_ref[...] = (out + b3_ref[...]).astype(out_ref.dtype)


def _round_up(x, m):
    return (x + m - 1) // m * m


def prepare_kernel_params(params):
    """Pad + cast f32 (in, out)-layout params for the kernel.

    Weights -> bf16; layer-1 K padded 60->64 (zero rows), layer-3 N padded
    8->128 (zero cols). Biases stay f32 (added after f32 accumulation).
    """
    w1 = jnp.zeros((OBS_PAD, HID), jnp.bfloat16)
    w1 = w1.at[:OBS_DIM, :].set(params["w1"].astype(jnp.bfloat16))
    w2 = params["w2"].astype(jnp.bfloat16)
    w3 = jnp.zeros((HID, OUT_PAD), jnp.bfloat16)
    w3 = w3.at[:, :ACT_DIM].set(params["w3"].astype(jnp.bfloat16))
    b1 = params["b1"].astype(jnp.float32)
    b2 = params["b2"].astype(jnp.float32)
    b3 = jnp.zeros((1, OUT_PAD), jnp.float32)
    b3 = b3.at[:, :ACT_DIM].set(params["b3"].astype(jnp.float32))
    return w1, b1, w2, b2, w3, b3


def actor_forward(obs, params, *, batch_tile=512):
    """Fused Actor MLP. obs: (B, 60) f32. Returns (action,) with action (B, 8) f32."""
    B = obs.shape[0]
    if B <= batch_tile:
        TB = max(8, _round_up(B, 8))
    else:
        TB = batch_tile
    B_pad = _round_up(B, TB)
    grid = (B_pad // TB,)

    # Pad obs to (B_pad, 64) and cast to bf16 once in the wrapper.
    obs_p = jnp.zeros((B_pad, OBS_PAD), jnp.bfloat16)
    obs_p = obs_p.at[:B, :OBS_DIM].set(obs.astype(jnp.bfloat16))

    w1, b1, w2, b2, w3, b3 = prepare_kernel_params(params)

    const_map = lambda i: (0, 0)   # weights/biases resident across grid steps

    flops = 2 * B_pad * (OBS_PAD * HID + HID * HID + HID * OUT_PAD)
    bytes_accessed = (obs_p.size * 2
                      + (w1.size + w2.size + w3.size) * 2
                      + (b1.size + b2.size + b3.size) * 4
                      + B_pad * OUT_PAD * 4)

    out_p = pl.pallas_call(
        _actor_mlp_kernel,
        out_shape=jax.ShapeDtypeStruct((B_pad, OUT_PAD), jnp.float32),
        grid=grid,
        in_specs=[
            pl.BlockSpec((TB, OBS_PAD), lambda i: (i, 0)),
            pl.BlockSpec(w1.shape, const_map),
            pl.BlockSpec(b1.shape, const_map),
            pl.BlockSpec(w2.shape, const_map),
            pl.BlockSpec(b2.shape, const_map),
            pl.BlockSpec(w3.shape, const_map),
            pl.BlockSpec(b3.shape, const_map),
        ],
        out_specs=pl.BlockSpec((TB, OUT_PAD), lambda i: (i, 0)),
        compiler_params=pltpu.CompilerParams(
            dimension_semantics=("parallel",)),
        cost_estimate=pl.CostEstimate(
            flops=flops, transcendentals=0, bytes_accessed=bytes_accessed),
    )(obs_p, w1, b1, w2, b2, w3, b3)

    action = out_p[:B, :ACT_DIM]
    return (action,)


def init_params(key):
    """Deterministic parameter init matching PyTorch Linear shapes.

    PyTorch stores Linear weight as (out, in); we store the transpose (in, out)
    so the kernel can do `x @ W` directly on the MXU.
    """
    dims = [(OBS_DIM, HID), (HID, HID), (HID, ACT_DIM)]
    params = {}
    for i, (fin, fout) in enumerate(dims, start=1):
        key, kw, kb = jax.random.split(key, 3)
        bound = 1.0 / jnp.sqrt(jnp.float32(fin))  # U(-1/sqrt(fin), 1/sqrt(fin))
        params[f"w{i}"] = jax.random.uniform(
            kw, (fin, fout), jnp.float32, -bound, bound)
        params[f"b{i}"] = jax.random.uniform(
            kb, (1, fout), jnp.float32, -bound, bound)
    return params


def _reference_forward_f32(obs, params):
    h1 = jnp.maximum(obs @ params["w1"] + params["b1"], 0.0)
    h2 = jnp.maximum(h1 @ params["w2"] + params["b2"], 0.0)
    return h2 @ params["w3"] + params["b3"]


def _reference_forward_bf16(obs, params):
    """Mirrors the kernel's bf16-compute / f32-accumulate path exactly."""
    w1 = params["w1"].astype(jnp.bfloat16)
    w2 = params["w2"].astype(jnp.bfloat16)
    w3 = params["w3"].astype(jnp.bfloat16)
    h1 = jnp.dot(obs.astype(jnp.bfloat16), w1,
                 preferred_element_type=jnp.float32) + params["b1"]
    h1 = jnp.maximum(h1, 0.0).astype(jnp.bfloat16)
    h2 = jnp.dot(h1, w2, preferred_element_type=jnp.float32) + params["b2"]
    h2 = jnp.maximum(h2, 0.0).astype(jnp.bfloat16)
    return jnp.dot(h2, w3, preferred_element_type=jnp.float32) + params["b3"]


if __name__ == "__main__":
    key = jax.random.PRNGKey(0)
    key, kobs = jax.random.split(key)

    batch = 8
    obs = jax.random.normal(kobs, (batch, OBS_DIM), dtype=jnp.float32)
    params = init_params(key)

    (action,) = actor_forward(obs, params)
    action = jax.block_until_ready(action)
    assert action.shape == (batch, ACT_DIM)
    assert action.dtype == jnp.float32

    # Tight check against a reference that mirrors the kernel's bf16/f32 path.
    ref_bf16 = _reference_forward_bf16(obs, params)
    assert jnp.allclose(action, ref_bf16, atol=2e-3, rtol=2e-3)

    # Loose check against the original full-f32 module semantics.
    ref_f32 = _reference_forward_f32(obs, params)
    assert jnp.allclose(action, ref_f32, atol=5e-2, rtol=5e-2)

    print("KERNEL_OK")
</pallas_src>

<mosaic_0001>
module attributes {stable_mosaic.version = 11 : i64} {
  func.func @_actor_mlp_kernel(%arg0: i32, %arg1: memref<8x64xbf16, #tpu.memory_space<vmem>>, %arg2: memref<64x256xbf16, #tpu.memory_space<vmem>>, %arg3: memref<1x256xf32, #tpu.memory_space<vmem>>, %arg4: memref<256x256xbf16, #tpu.memory_space<vmem>>, %arg5: memref<1x256xf32, #tpu.memory_space<vmem>>, %arg6: memref<256x128xbf16, #tpu.memory_space<vmem>>, %arg7: memref<1x128xf32, #tpu.memory_space<vmem>>, %arg8: memref<8x128xf32, #tpu.memory_space<vmem>>) attributes {dimension_semantics = [#tpu.dimension_semantics<parallel>], iteration_bounds = array<i64: 1>, scalar_prefetch = 0 : i64, scratch_operands = 0 : i64, tpu.core_type = #tpu.core_type<tc>, window_params = [{transform_indices = @transform_0, window_bounds = array<i64: 8, 64>}, {pipeline_mode = #tpu.pipeline_mode<synchronous>, transform_indices = @transform_1, window_bounds = array<i64: 64, 256>}, {pipeline_mode = #tpu.pipeline_mode<synchronous>, transform_indices = @transform_2, window_bounds = array<i64: 1, 256>}, {pipeline_mode = #tpu.pipeline_mode<synchronous>, transform_indices = @transform_3, window_bounds = array<i64: 256, 256>}, {pipeline_mode = #tpu.pipeline_mode<synchronous>, transform_indices = @transform_4, window_bounds = array<i64: 1, 256>}, {pipeline_mode = #tpu.pipeline_mode<synchronous>, transform_indices = @transform_5, window_bounds = array<i64: 256, 128>}, {pipeline_mode = #tpu.pipeline_mode<synchronous>, transform_indices = @transform_6, window_bounds = array<i64: 1, 128>}, {transform_indices = @transform_7, window_bounds = array<i64: 8, 128>}]} {
    %c0 = arith.constant 0 : index
    %c0_0 = arith.constant 0 : index
    %0 = vector.load %arg1[%c0, %c0_0] : memref<8x64xbf16, #tpu.memory_space<vmem>>, vector<8x64xbf16>
    %c0_1 = arith.constant 0 : index
    %c0_2 = arith.constant 0 : index
    %1 = vector.load %arg2[%c0_1, %c0_2] : memref<64x256xbf16, #tpu.memory_space<vmem>>, vector<64x256xbf16>
    %cst = arith.constant dense<0.000000e+00> : vector<8x256xf32>
    %2 = tpu.matmul %0, %1, %cst {dimension_numbers = #tpu.dot_dimension_numbers<[1], [0], [0], [1], [0, 0, 1, 1], [], []>} : vector<8x64xbf16>, vector<64x256xbf16>, vector<8x256xf32> -> vector<8x256xf32>
    %c0_3 = arith.constant 0 : index
    %c0_4 = arith.constant 0 : index
    %3 = vector.load %arg3[%c0_3, %c0_4] : memref<1x256xf32, #tpu.memory_space<vmem>>, vector<1x256xf32>
    %4 = vector.broadcast %3 : vector<1x256xf32> to vector<8x256xf32>
    %5 = arith.addf %2, %4 : vector<8x256xf32>
    %cst_5 = arith.constant 0.000000e+00 : f32
    %6 = vector.broadcast %cst_5 : f32 to vector<8x256xf32>
    %7 = arith.maximumf %5, %6 : vector<8x256xf32>
    %8 = arith.truncf %7 : vector<8x256xf32> to vector<8x256xbf16>
    %c0_6 = arith.constant 0 : index
    %c0_7 = arith.constant 0 : index
    %9 = vector.load %arg4[%c0_6, %c0_7] : memref<256x256xbf16, #tpu.memory_space<vmem>>, vector<256x256xbf16>
    %cst_8 = arith.constant dense<0.000000e+00> : vector<8x256xf32>
    %10 = tpu.matmul %8, %9, %cst_8 {dimension_numbers = #tpu.dot_dimension_numbers<[1], [0], [0], [1], [0, 0, 1, 1], [], []>} : vector<8x256xbf16>, vector<256x256xbf16>, vector<8x256xf32> -> vector<8x256xf32>
    %c0_9 = arith.constant 0 : index
    %c0_10 = arith.constant 0 : index
    %11 = vector.load %arg5[%c0_9, %c0_10] : memref<1x256xf32, #tpu.memory_space<vmem>>, vector<1x256xf32>
    %12 = vector.broadcast %11 : vector<1x256xf32> to vector<8x256xf32>
    %13 = arith.addf %10, %12 : vector<8x256xf32>
    %cst_11 = arith.constant 0.000000e+00 : f32
    %14 = vector.broadcast %cst_11 : f32 to vector<8x256xf32>
    %15 = arith.maximumf %13, %14 : vector<8x256xf32>
    %16 = arith.truncf %15 : vector<8x256xf32> to vector<8x256xbf16>
    %c0_12 = arith.constant 0 : index
    %c0_13 = arith.constant 0 : index
    %17 = vector.load %arg6[%c0_12, %c0_13] : memref<256x128xbf16, #tpu.memory_space<vmem>>, vector<256x128xbf16>
    %cst_14 = arith.constant dense<0.000000e+00> : vector<8x128xf32>
    %18 = tpu.matmul %16, %17, %cst_14 {dimension_numbers = #tpu.dot_dimension_numbers<[1], [0], [0], [1], [0, 0, 1, 1], [], []>} : vector<8x256xbf16>, vector<256x128xbf16>, vector<8x128xf32> -> vector<8x128xf32>
    %c0_15 = arith.constant 0 : index
    %c0_16 = arith.constant 0 : index
    %19 = vector.load %arg7[%c0_15, %c0_16] : memref<1x128xf32, #tpu.memory_space<vmem>>, vector<1x128xf32>
    %20 = vector.broadcast %19 : vector<1x128xf32> to vector<8x128xf32>
    %21 = arith.addf %18, %20 : vector<8x128xf32>
    %c0_17 = arith.constant 0 : index
    %c0_18 = arith.constant 0 : index
    %22 = vector.load %arg8[%c0_17, %c0_18] : memref<8x128xf32, #tpu.memory_space<vmem>>, vector<8x128xf32>
    tpu.vector_store %arg8[%c0_17, %c0_18], %21 {strides = array<i32>} : memref<8x128xf32, #tpu.memory_space<vmem>>, vector<8x128xf32>,
    return
  }
  func.func @transform_0(%arg0: i32) -> (i32, i32) {
    %c0_i32 = arith.constant 0 : i32
    %c0_i32_0 = arith.constant 0 : i32
    return %arg0, %c0_i32 : i32, i32
  }
  func.func @transform_1(%arg0: i32) -> (i32, i32) {
    %c0_i32 = arith.constant 0 : i32
    %c0_i32_0 = arith.constant 0 : i32
    %c0_i32_1 = arith.constant 0 : i32
    return %c0_i32, %c0_i32_0 : i32, i32
  }
  func.func @transform_2(%arg0: i32) -> (i32, i32) {
    %c0_i32 = arith.constant 0 : i32
    %c0_i32_0 = arith.constant 0 : i32
    %c0_i32_1 = arith.constant 0 : i32
    return %c0_i32, %c0_i32_0 : i32, i32
  }
  func.func @transform_3(%arg0: i32) -> (i32, i32) {
    %c0_i32 = arith.constant 0 : i32
    %c0_i32_0 = arith.constant 0 : i32
    %c0_i32_1 = arith.constant 0 : i32
    return %c0_i32, %c0_i32_0 : i32, i32
  }
  func.func @transform_4(%arg0: i32) -> (i32, i32) {
    %c0_i32 = arith.constant 0 : i32
    %c0_i32_0 = arith.constant 0 : i32
    %c0_i32_1 = arith.constant 0 : i32
    return %c0_i32, %c0_i32_0 : i32, i32
  }
  func.func @transform_5(%arg0: i32) -> (i32, i32) {
    %c0_i32 = arith.constant 0 : i32
    %c0_i32_0 = arith.constant 0 : i32
    %c0_i32_1 = arith.constant 0 : i32
    return %c0_i32, %c0_i32_0 : i32, i32
  }
  func.func @transform_6(%arg0: i32) -> (i32, i32) {
    %c0_i32 = arith.constant 0 : i32
    %c0_i32_0 = arith.constant 0 : i32
    %c0_i32_1 = arith.constant 0 : i32
    return %c0_i32, %c0_i32_0 : i32, i32
  }
  func.func @transform_7(%arg0: i32) -> (i32, i32) {
    %c0_i32 = arith.constant 0 : i32
    %c0_i32_0 = arith.constant 0 : i32
    return %arg0, %c0_i32 : i32, i32
  }
}

</mosaic_0001>

<llo_original>
// kernel: tpu_custom_call.1
$region0: #{tpu_custom_call.1}
  #allocation0 [shape = 'u32[]', space=smem, size = 0x4, offset = 0x4, fixed_abs, tag = 'smem constant byte address 0x4 - core index']
  #allocation1 [shape = 'u32[72,128]{1,0:T(1,128)}', space=vmem, size = 0x9000, scoped, tag = 'internal scratch']
  %s0 = inlined_call_operand.hbm [shape: bf16[8,64], index: 0, kind: input, shape index: {}]
  %s1 = inlined_call_operand.hbm [shape: bf16[64,256], index: 1, kind: input, shape index: {}]
  %s2 = inlined_call_operand.hbm [shape: f32[1,256], index: 2, kind: input, shape index: {}]
  %s3 = inlined_call_operand.hbm [shape: bf16[256,256], index: 3, kind: input, shape index: {}]
  %s4 = inlined_call_operand.vmem [shape: f32[1,256], index: 4, kind: input, shape index: {}]
  %s5 = inlined_call_operand.hbm [shape: bf16[256,128], index: 5, kind: input, shape index: {}]
  %s6 = inlined_call_operand.vmem [shape: f32[1,128], index: 6, kind: input, shape index: {}]
  %s7 = inlined_call_operand.hbm [shape: f32[8,128], index: 7, kind: output, shape index: {}]
  %s8 = sld [smem:[#allocation0]]
  $region58: #{tpu_custom_call.1} parent=0
    _
  %s10 = ssub.s32 1, %s8
  %s11 = scalar_select 0, %s10, %s8
  $region1: #{tpu_custom_call.1} parent=0
    #allocation2 [shape = 'u8[2048]{0}', space=vmem, size = 0x800, scoped, tag = 'input window, operand 0, single buffered']
    #allocation3 [shape = 's32[1]{0}', space=sflag, size = 0x4, scoped, tag = 'scoped memory for tpu_custom_call.1']
    #allocation4 [shape = 's32[1]{0}', space=sflag, size = 0x4, scoped, tag = 'scoped memory for tpu_custom_call.1']
    #allocation5 [shape = 'u8[32768]{0}', space=vmem, size = 0x8000, scoped, tag = 'input window, operand 1, single buffered']
    #allocation6 [shape = 's32[1]{0}', space=sflag, size = 0x4, scoped, tag = 'scoped memory for tpu_custom_call.1']
    #allocation7 [shape = 'u8[1024]{0}', space=vmem, size = 0x400, scoped, tag = 'input window, operand 2, single buffered']
    #allocation8 [shape = 'u8[131072]{0}', space=vmem, size = 0x20000, scoped, tag = 'input window, operand 3, single buffered']
    #allocation9 [shape = 's32[1]{0}', space=sflag, size = 0x4, scoped, tag = 'scoped memory for tpu_custom_call.1']
    #allocation10 [shape = 'u8[65536]{0}', space=vmem, size = 0x10000, scoped, tag = 'input window, operand 5, single buffered']
    #allocation11 [shape = 'u8[4096]{0}', space=vmem, size = 0x1000, scoped, tag = 'output window, operand 0, single buffered']
    %12 = vsyncpa [#allocation3], 0
    %13 = vsyncpa [#allocation6], 0
    %14 = vsyncpa [#allocation9], 0
    %15 = vsyncpa [#allocation4], 0
    // Predicated region
    $region2: #{tpu_custom_call.1} parent=1 // pred_check
      _
    $region3: #{tpu_custom_call.1} parent=1 // pred_check_branch
      %17 = sbr.rel (0) target = $region5
    $region4: #{tpu_custom_call.1} parent=1 // pred_region
      %19 = vsyncadd [#allocation3], 0
      %s21 = sshll.u32 %s0, 4
      %s22 = int_to_ptr.hbm [resolvable:$true] %s21
      %s23 = sshll.u32 [#allocation2], 4
      %s24 = int_to_ptr.vmem [resolvable:$true] %s23
      %26 = dma.hbm_to_vmem [thread:$0]  %s22, 64, %s24, [#allocation3]
    $region5: #{tpu_custom_call.1} parent=1 // pred_fallthru
      _
    // Predicated region
    $region6: #{tpu_custom_call.1} parent=1 // pred_check
      _
    $region7: #{tpu_custom_call.1} parent=1 // pred_check_branch
      %28 = sbr.rel (0) target = $region9
    $region8: #{tpu_custom_call.1} parent=1 // pred_region
      %30 = vsyncadd [#allocation6], 0
      %s31 = sshll.u32 %s1, 4
      %s32 = int_to_ptr.hbm [resolvable:$true] %s31
      %s33 = sshll.u32 [#allocation5], 4
      %s34 = int_to_ptr.vmem [resolvable:$true] %s33
      %39 = dma.hbm_to_vmem [thread:$0]  %s32, 1024, %s34, [#allocation6], 128, 128, 8
    $region9: #{tpu_custom_call.1} parent=1 // pred_fallthru
      _
    // Predicated region
    $region10: #{tpu_custom_call.1} parent=1 // pred_check
      _
    $region11: #{tpu_custom_call.1} parent=1 // pred_check_branch
      %41 = sbr.rel (0) target = $region13
    $region12: #{tpu_custom_call.1} parent=1 // pred_region
      %43 = vsyncadd [#allocation6], 0
      %s45 = sshll.u32 %s2, 4
      %s46 = int_to_ptr.hbm [resolvable:$true] %s45
      %s47 = sshll.u32 [#allocation7], 4
      %s48 = int_to_ptr.vmem [resolvable:$true] %s47
      %50 = dma.hbm_to_vmem [thread:$0]  %s46, 32, %s48, [#allocation6]
    $region13: #{tpu_custom_call.1} parent=1 // pred_fallthru
      _
    // Predicated region
    $region14: #{tpu_custom_call.1} parent=1 // pred_check
      _
    $region15: #{tpu_custom_call.1} parent=1 // pred_check_branch
      %52 = sbr.rel (0) target = $region17
    $region16: #{tpu_custom_call.1} parent=1 // pred_region
      %54 = vsyncadd [#allocation9], 0
      %s55 = sshll.u32 %s3, 4
      %s56 = int_to_ptr.hbm [resolvable:$true] %s55
      %s57 = sshll.u32 [#allocation8], 4
      %s58 = int_to_ptr.vmem [resolvable:$true] %s57
      %63 = dma.hbm_to_vmem [thread:$0]  %s56, 4096, %s58, [#allocation9], 128, 128, 8
    $region17: #{tpu_custom_call.1} parent=1 // pred_fallthru
      _
    // Predicated region
    $region18: #{tpu_custom_call.1} parent=1 // pred_check
      _
    $region19: #{tpu_custom_call.1} parent=1 // pred_check_branch
      %65 = sbr.rel (0) target = $region21
    $region20: #{tpu_custom_call.1} parent=1 // pred_region
      _
    $region21: #{tpu_custom_call.1} parent=1 // pred_fallthru
      _
    // Predicated region
    $region22: #{tpu_custom_call.1} parent=1 // pred_check
      _
    $region23: #{tpu_custom_call.1} parent=1 // pred_check_branch
      %67 = sbr.rel (0) target = $region25
    $region24: #{tpu_custom_call.1} parent=1 // pred_region
      %69 = vsyncadd [#allocation9], 0
      %s70 = sshll.u32 %s5, 4
      %s71 = int_to_ptr.hbm [resolvable:$true] %s70
      %s72 = sshll.u32 [#allocation10], 4
      %s73 = int_to_ptr.vmem [resolvable:$true] %s72
      %78 = dma.hbm_to_vmem [thread:$0]  %s71, 2048, %s73, [#allocation9], 64, 64, 4
    $region25: #{tpu_custom_call.1} parent=1 // pred_fallthru
      _
    // Predicated region
    $region26: #{tpu_custom_call.1} parent=1 // pred_check
      _
    $region27: #{tpu_custom_call.1} parent=1 // pred_check_branch
      %80 = sbr.rel (0) target = $region29
    $region28: #{tpu_custom_call.1} parent=1 // pred_region
      _
    $region29: #{tpu_custom_call.1} parent=1 // pred_fallthru
      _
    // Predicated region
    $region30: #{tpu_custom_call.1} parent=1 // pred_check
      _
    $region31: #{tpu_custom_call.1} parent=1 // pred_check_branch
      %82 = sbr.rel (0) target = $region33
    $region32: #{tpu_custom_call.1} parent=1 // pred_region
      %84 = dma.done [#allocation3], 64
    $region33: #{tpu_custom_call.1} parent=1 // pred_fallthru
      _
    // Predicated region
    $region34: #{tpu_custom_call.1} parent=1 // pred_check
      _
    $region35: #{tpu_custom_call.1} parent=1 // pred_check_branch
      %86 = sbr.rel (0) target = $region37
    $region36: #{tpu_custom_call.1} parent=1 // pred_region
      %88 = dma.done [#allocation6], 1024
    $region37: #{tpu_custom_call.1} parent=1 // pred_fallthru
      _
    // Predicated region
    $region38: #{tpu_custom_call.1} parent=1 // pred_check
      _
    $region39: #{tpu_custom_call.1} parent=1 // pred_check_branch
      %90 = sbr.rel (0) target = $region41
    $region40: #{tpu_custom_call.1} parent=1 // pred_region
      %92 = dma.done [#allocation6], 32
    $region41: #{tpu_custom_call.1} parent=1 // pred_fallthru
      _
    // Predicated region
    $region42: #{tpu_custom_call.1} parent=1 // pred_check
      _
    $region43: #{tpu_custom_call.1} parent=1 // pred_check_branch
      %94 = sbr.rel (0) target = $region45
    $region44: #{tpu_custom_call.1} parent=1 // pred_region
      %96 = dma.done [#allocation9], 4096
    $region45: #{tpu_custom_call.1} parent=1 // pred_fallthru
      _
    // Predicated region
    $region46: #{tpu_custom_call.1} parent=1 // pred_check
      _
    $region47: #{tpu_custom_call.1} parent=1 // pred_check_branch
      %98 = sbr.rel (0) target = $region49
    $region48: #{tpu_custom_call.1} parent=1 // pred_region
      %100 = dma.done [#allocation9], 2048
    $region49: #{tpu_custom_call.1} parent=1 // pred_fallthru
      _
    %v102 = vld [vmem:[#allocation2] sm:$0xf]
    %v103 = vld [vmem:[#allocation5] sm:$0xff]
    %v104 = vld [vmem:[#allocation5 + $0x8] sm:$0xff]
    %v105 = vld [vmem:[#allocation5 + $0x10] sm:$0xff]
    %v106 = vld [vmem:[#allocation5 + $0x18] sm:$0xff]
    %v107 = vld [vmem:[#allocation5 + $0x20] sm:$0xff]
    %v108 = vld [vmem:[#allocation5 + $0x28] sm:$0xff]
    %v109 = vld [vmem:[#allocation5 + $0x30] sm:$0xff]
    %v110 = vld [vmem:[#allocation5 + $0x38] sm:$0xff]
    %v111 = vld [vmem:[#allocation7] sm:$0x3]
    %v113 = vperm.slane %v111, 0
    %v114 = vperm.slane %v111, 1
    %v125 = vunpack.c.l.b16 %v103
    %v126 = vunpack.c.h.b16 %v103
    %v127 = vunpack.c.l.b16 %v104
    %v128 = vunpack.c.h.b16 %v104
    %v129 = vunpack.c.l.b16 %v105
    %v130 = vunpack.c.h.b16 %v105
    %v131 = vunpack.c.l.b16 %v106
    %v132 = vunpack.c.h.b16 %v106
    %v133 = vunpack.c.l.b16 %v107
    %v134 = vunpack.c.h.b16 %v107
    %v135 = vunpack.c.l.b16 %v108
    %v136 = vunpack.c.h.b16 %v108
    %v137 = vunpack.c.l.b16 %v109
    %v138 = vunpack.c.h.b16 %v109
    %v139 = vunpack.c.l.b16 %v110
    %v140 = vunpack.c.h.b16 %v110
    %v141 = vpack.c.b16 %v127, %v125
    %v142 = vpack.c.b16 %v128, %v126
    %v143 = vpack.c.b16 %v131, %v129
    %v144 = vpack.c.b16 %v132, %v130
    %v145 = vpack.c.b16 %v135, %v133
    %v146 = vpack.c.b16 %v136, %v134
    %v147 = vpack.c.b16 %v139, %v137
    %v148 = vpack.c.b16 %v140, %v138
    %vm157 = vcmask 523264
    %v159 = vsel %vm157, %v102, 0
    %161 = vmatpush.bf16.msra.mxu0 0
    %162 = vmatpush.bf16.msra.mxu0 0
    %163 = vmatpush.bf16.msra.mxu0 0
    %164 = vmatpush.bf16.msra.mxu0 0
    %165 = vmatpush.bf16.msra.mxu0 %v147
    %166 = vmatpush.bf16.msra.mxu0 %v145
    %167 = vmatpush.bf16.msra.mxu0 %v143
    %168 = vmatpush.bf16.msra.mxu0 %v141
    %169 = vmatmul.bf16.gmra.mxu0 %v159
    %v170 = vpop.f32.mrf.mxu0
    %v171 = vadd.f32 %v113, %v170
    %v172 = vpop.f32.mrf.mxu0
    %173 = vdwg.mxu0
    %174 = vmatpush.bf16.msra.mxu0 0
    %175 = vmatpush.bf16.msra.mxu0 0
    %176 = vmatpush.bf16.msra.mxu0 0
    %177 = vmatpush.bf16.msra.mxu0 0
    %178 = vmatpush.bf16.msra.mxu0 %v148
    %179 = vmatpush.bf16.msra.mxu0 %v146
    %180 = vmatpush.bf16.msra.mxu0 %v144
    %181 = vmatpush.bf16.msra.mxu0 %v142
    %182 = vmatmul.bf16.gmra.mxu0 %v159
    %v183 = vpop.f32.mrf.mxu0
    %v184 = vadd.f32 %v114, %v183
    %v185 = vpop.f32.mrf.mxu0
    %186 = vdwg.mxu0
    %v187 = vmax.f32 %v171, 0.0
    %v188 = vmax.f32 %v184, 0.0
    %v189 = vpack.c.bf16 %v187, %v187
    %v190 = vpack.c.bf16 %v188, %v188
    %v191 = vld [vmem:[#allocation8] sm:$0xff]
    %v192 = vld [vmem:[#allocation8 + $0x8] sm:$0xff]
    %v193 = vld [vmem:[#allocation8 + $0x10] sm:$0xff]
    %v194 = vld [vmem:[#allocation8 + $0x18] sm:$0xff]
    %v195 = vld [vmem:[#allocation8 + $0x20] sm:$0xff]
    %v196 = vld [vmem:[#allocation8 + $0x28] sm:$0xff]
    %v197 = vld [vmem:[#allocation8 + $0x30] sm:$0xff]
    %v198 = vld [vmem:[#allocation8 + $0x38] sm:$0xff]
    %v199 = vld [vmem:[#allocation8 + $0x40] sm:$0xff]
    %v200 = vld [vmem:[#allocation8 + $0x48] sm:$0xff]
    %v201 = vld [vmem:[#allocation8 + $0x50] sm:$0xff]
    %v202 = vld [vmem:[#allocation8 + $0x58] sm:$0xff]
    %v203 = vld [vmem:[#allocation8 + $0x60] sm:$0xff]
    %v204 = vld [vmem:[#allocation8 + $0x68] sm:$0xff]
    %v205 = vld [vmem:[#allocation8 + $0x70] sm:$0xff]
    %v206 = vld [vmem:[#allocation8 + $0x78] sm:$0xff]
    %v207 = vld [vmem:[#allocation8 + $0x80] sm:$0xff]
    %v208 = vld [vmem:[#allocation8 + $0x88] sm:$0xff]
    %v209 = vld [vmem:[#allocation8 + $0x90] sm:$0xff]
    %v210 = vld [vmem:[#allocation8 + $0x98] sm:$0xff]
    %v211 = vld [vmem:[#allocation8 + $0xa0] sm:$0xff]
    %v212 = vld [vmem:[#allocation8 + $0xa8] sm:$0xff]
    %v213 = vld [vmem:[#allocation8 + $0xb0] sm:$0xff]
    %v214 = vld [vmem:[#allocation8 + $0xb8] sm:$0xff]
    %v215 = vld [vmem:[#allocation8 + $0xc0] sm:$0xff]
    %v216 = vld [vmem:[#allocation8 + $0xc8] sm:$0xff]
    %v217 = vld [vmem:[#allocation8 + $0xd0] sm:$0xff]
    %v218 = vld [vmem:[#allocation8 + $0xd8] sm:$0xff]
    %v219 = vld [vmem:[#allocation8 + $0xe0] sm:$0xff]
    %v220 = vld [vmem:[#allocation8 + $0xe8] sm:$0xff]
    %v221 = vld [vmem:[#allocation8 + $0xf0] sm:$0xff]
    %v222 = vld [vmem:[#allocation8 + $0xf8] sm:$0xff]
    %v223 = vld [vmem:[%s4] sm:$0x3]
    %v225 = vperm.slane %v223, 0
    %v226 = vperm.slane %v223, 1
    %v261 = vunpack.c.l.b16 %v191
    %v262 = vunpack.c.h.b16 %v191
    %v263 = vunpack.c.l.b16 %v192
    %v264 = vunpack.c.h.b16 %v192
    %v265 = vunpack.c.l.b16 %v193
    %v266 = vunpack.c.h.b16 %v193
    %v267 = vunpack.c.l.b16 %v194
    %v268 = vunpack.c.h.b16 %v194
    %v269 = vunpack.c.l.b16 %v195
    %v270 = vunpack.c.h.b16 %v195
    %v271 = vunpack.c.l.b16 %v196
    %v272 = vunpack.c.h.b16 %v196
    %v273 = vunpack.c.l.b16 %v197
    %v274 = vunpack.c.h.b16 %v197
    %v275 = vunpack.c.l.b16 %v198
    %v276 = vunpack.c.h.b16 %v198
    %v277 = vunpack.c.l.b16 %v199
    %v278 = vunpack.c.h.b16 %v199
    %v279 = vunpack.c.l.b16 %v200
    %v280 = vunpack.c.h.b16 %v200
    %v281 = vunpack.c.l.b16 %v201
    %v282 = vunpack.c.h.b16 %v201
    %v283 = vunpack.c.l.b16 %v202
    %v284 = vunpack.c.h.b16 %v202
    %v285 = vunpack.c.l.b16 %v203
    %v286 = vunpack.c.h.b16 %v203
    %v287 = vunpack.c.l.b16 %v204
    %v288 = vunpack.c.h.b16 %v204
    %v289 = vunpack.c.l.b16 %v205
    %v290 = vunpack.c.h.b16 %v205
    %v291 = vunpack.c.l.b16 %v206
    %v292 = vunpack.c.h.b16 %v206
    %v293 = vunpack.c.l.b16 %v207
    %v294 = vunpack.c.h.b16 %v207
    %v295 = vunpack.c.l.b16 %v208
    %v296 = vunpack.c.h.b16 %v208
    %v297 = vunpack.c.l.b16 %v209
    %v298 = vunpack.c.h.b16 %v209
    %v299 = vunpack.c.l.b16 %v210
    %v300 = vunpack.c.h.b16 %v210
    %v301 = vunpack.c.l.b16 %v211
    %v302 = vunpack.c.h.b16 %v211
    %v303 = vunpack.c.l.b16 %v212
    %v304 = vunpack.c.h.b16 %v212
    %v305 = vunpack.c.l.b16 %v213
    %v306 = vunpack.c.h.b16 %v213
    %v307 = vunpack.c.l.b16 %v214
    %v308 = vunpack.c.h.b16 %v214
    %v309 = vunpack.c.l.b16 %v215
    %v310 = vunpack.c.h.b16 %v215
    %v311 = vunpack.c.l.b16 %v216
    %v312 = vunpack.c.h.b16 %v216
    %v313 = vunpack.c.l.b16 %v217
    %v314 = vunpack.c.h.b16 %v217
    %v315 = vunpack.c.l.b16 %v218
    %v316 = vunpack.c.h.b16 %v218
    %v317 = vunpack.c.l.b16 %v219
    %v318 = vunpack.c.h.b16 %v219
    %v319 = vunpack.c.l.b16 %v220
    %v320 = vunpack.c.h.b16 %v220
    %v321 = vunpack.c.l.b16 %v221
    %v322 = vunpack.c.h.b16 %v221
    %v323 = vunpack.c.l.b16 %v222
    %v324 = vunpack.c.h.b16 %v222
    %v325 = vpack.c.b16 %v263, %v261
    %v326 = vpack.c.b16 %v264, %v262
    %v327 = vpack.c.b16 %v267, %v265
    %v328 = vpack.c.b16 %v268, %v266
    %v329 = vpack.c.b16 %v271, %v269
    %v330 = vpack.c.b16 %v272, %v270
    %v331 = vpack.c.b16 %v275, %v273
    %v332 = vpack.c.b16 %v276, %v274
    %v333 = vpack.c.b16 %v279, %v277
    %v334 = vpack.c.b16 %v280, %v278
    %v335 = vpack.c.b16 %v283, %v281
    %v336 = vpack.c.b16 %v284, %v282
    %v337 = vpack.c.b16 %v287, %v285
    %v338 = vpack.c.b16 %v288, %v286
    %v339 = vpack.c.b16 %v291, %v289
    %v340 = vpack.c.b16 %v292, %v290
    %v341 = vpack.c.b16 %v295, %v293
    %v342 = vpack.c.b16 %v296, %v294
    %v343 = vpack.c.b16 %v299, %v297
    %v344 = vpack.c.b16 %v300, %v298
    %v345 = vpack.c.b16 %v303, %v301
    %v346 = vpack.c.b16 %v304, %v302
    %v347 = vpack.c.b16 %v307, %v305
    %v348 = vpack.c.b16 %v308, %v306
    %v349 = vpack.c.b16 %v311, %v309
    %v350 = vpack.c.b16 %v312, %v310
    %v351 = vpack.c.b16 %v315, %v313
    %v352 = vpack.c.b16 %v316, %v314
    %v353 = vpack.c.b16 %v319, %v317
    %v354 = vpack.c.b16 %v320, %v318
    %v355 = vpack.c.b16 %v323, %v321
    %v356 = vpack.c.b16 %v324, %v322
    %389 = vmatpush.bf16.msra.mxu0 %v339
    %390 = vmatpush.bf16.msra.mxu0 %v337
    %391 = vmatpush.bf16.msra.mxu0 %v335
    %392 = vmatpush.bf16.msra.mxu0 %v333
    %393 = vmatpush.bf16.msra.mxu0 %v331
    %394 = vmatpush.bf16.msra.mxu0 %v329
    %395 = vmatpush.bf16.msra.mxu0 %v327
    %396 = vmatpush.bf16.msra.mxu0 %v325
    %397 = vmatmul.bf16.gmra.mxu0 %v189
    %v398 = vpop.f32.mrf.mxu0
    %v399 = vadd.f32 %v225, %v398
    %v400 = vpop.f32.mrf.mxu0
    %401 = vdwg.mxu0
    %402 = vmatpush.bf16.msra.mxu0 %v355
    %403 = vmatpush.bf16.msra.mxu0 %v353
    %404 = vmatpush.bf16.msra.mxu0 %v351
    %405 = vmatpush.bf16.msra.mxu0 %v349
    %406 = vmatpush.bf16.msra.mxu0 %v347
    %407 = vmatpush.bf16.msra.mxu0 %v345
    %408 = vmatpush.bf16.msra.mxu0 %v343
    %409 = vmatpush.bf16.msra.mxu0 %v341
    %410 = vmatmul.bf16.gmra.mxu0 %v190
    %v411 = vpop.f32.mrf.mxu0
    %v412 = vadd.f32 %v399, %v411
    %v413 = vpop.f32.mrf.mxu0
    %414 = vdwg.mxu0
    %415 = vmatpush.bf16.msra.mxu0 %v340
    %416 = vmatpush.bf16.msra.mxu0 %v338
    %417 = vmatpush.bf16.msra.mxu0 %v336
    %418 = vmatpush.bf16.msra.mxu0 %v334
    %419 = vmatpush.bf16.msra.mxu0 %v332
    %420 = vmatpush.bf16.msra.mxu0 %v330
    %421 = vmatpush.bf16.msra.mxu0 %v328
    %422 = vmatpush.bf16.msra.mxu0 %v326
    %423 = vmatmul.bf16.gmra.mxu0 %v189
    %v424 = vpop.f32.mrf.mxu0
    %v425 = vadd.f32 %v226, %v424
    %v426 = vpop.f32.mrf.mxu0
    %427 = vdwg.mxu0
    %428 = vmatpush.bf16.msra.mxu0 %v356
    %429 = vmatpush.bf16.msra.mxu0 %v354
    %430 = vmatpush.bf16.msra.mxu0 %v352
    %431 = vmatpush.bf16.msra.mxu0 %v350
    %432 = vmatpush.bf16.msra.mxu0 %v348
    %433 = vmatpush.bf16.msra.mxu0 %v346
    %434 = vmatpush.bf16.msra.mxu0 %v344
    %435 = vmatpush.bf16.msra.mxu0 %v342
    %436 = vmatmul.bf16.gmra.mxu0 %v190
    %v437 = vpop.f32.mrf.mxu0
    %v438 = vadd.f32 %v425, %v437
    %v439 = vpop.f32.mrf.mxu0
    %440 = vdwg.mxu0
    %v441 = vmax.f32 %v412, 0.0
    %v442 = vmax.f32 %v438, 0.0
    %v443 = vpack.c.bf16 %v441, %v441
    %v444 = vpack.c.bf16 %v442, %v442
    %v445 = vld [vmem:[#allocation10] sm:$0xf]
    %v446 = vld [vmem:[#allocation10 + $0x4] sm:$0xf]
    %v447 = vld [vmem:[#allocation10 + $0x8] sm:$0xf]
    %v448 = vld [vmem:[#allocation10 + $0xc] sm:$0xf]
    %v449 = vld [vmem:[#allocation10 + $0x10] sm:$0xf]
    %v450 = vld [vmem:[#allocation10 + $0x14] sm:$0xf]
    %v451 = vld [vmem:[#allocation10 + $0x18] sm:$0xf]
    %v452 = vld [vmem:[#allocation10 + $0x1c] sm:$0xf]
    %v453 = vld [vmem:[#allocation10 + $0x20] sm:$0xf]
    %v454 = vld [vmem:[#allocation10 + $0x24] sm:$0xf]
    %v455 = vld [vmem:[#allocation10 + $0x28] sm:$0xf]
    %v456 = vld [vmem:[#allocation10 + $0x2c] sm:$0xf]
    %v457 = vld [vmem:[#allocation10 + $0x30] sm:$0xf]
    %v458 = vld [vmem:[#allocation10 + $0x34] sm:$0xf]
    %v459 = vld [vmem:[#allocation10 + $0x38] sm:$0xf]
    %v460 = vld [vmem:[#allocation10 + $0x3c] sm:$0xf]
    %v461 = vld [vmem:[#allocation10 + $0x40] sm:$0xf]
    %v462 = vld [vmem:[#allocation10 + $0x44] sm:$0xf]
    %v463 = vld [vmem:[#allocation10 + $0x48] sm:$0xf]
    %v464 = vld [vmem:[#allocation10 + $0x4c] sm:$0xf]
    %v465 = vld [vmem:[#allocation10 + $0x50] sm:$0xf]
    %v466 = vld [vmem:[#allocation10 + $0x54] sm:$0xf]
    %v467 = vld [vmem:[#allocation10 + $0x58] sm:$0xf]
    %v468 = vld [vmem:[#allocation10 + $0x5c] sm:$0xf]
    %v469 = vld [vmem:[#allocation10 + $0x60] sm:$0xf]
    %v470 = vld [vmem:[#allocation10 + $0x64] sm:$0xf]
    %v471 = vld [vmem:[#allocation10 + $0x68] sm:$0xf]
    %v472 = vld [vmem:[#allocation10 + $0x6c] sm:$0xf]
    %v473 = vld [vmem:[#allocation10 + $0x70] sm:$0xf]
    %v474 = vld [vmem:[#allocation10 + $0x74] sm:$0xf]
    %v475 = vld [vmem:[#allocation10 + $0x78] sm:$0xf]
    %v476 = vld [vmem:[#allocation10 + $0x7c] sm:$0xf]
    %v477 = vld [vmem:[%s6] sm:$0x1]
    %v479 = vperm.slane %v477, 0
    %v513 = vunpack.c.l.b16 %v445
    %v514 = vunpack.c.l.b16 %v446
    %v515 = vunpack.c.l.b16 %v447
    %v516 = vunpack.c.l.b16 %v448
    %v517 = vunpack.c.l.b16 %v449
    %v518 = vunpack.c.l.b16 %v450
    %v519 = vunpack.c.l.b16 %v451
    %v520 = vunpack.c.l.b16 %v452
    %v521 = vunpack.c.l.b16 %v453
    %v522 = vunpack.c.l.b16 %v454
    %v523 = vunpack.c.l.b16 %v455
    %v524 = vunpack.c.l.b16 %v456
    %v525 = vunpack.c.l.b16 %v457
    %v526 = vunpack.c.l.b16 %v458
    %v527 = vunpack.c.l.b16 %v459
    %v528 = vunpack.c.l.b16 %v460
    %v529 = vunpack.c.l.b16 %v461
    %v530 = vunpack.c.l.b16 %v462
    %v531 = vunpack.c.l.b16 %v463
    %v532 = vunpack.c.l.b16 %v464
    %v533 = vunpack.c.l.b16 %v465
    %v534 = vunpack.c.l.b16 %v466
    %v535 = vunpack.c.l.b16 %v467
    %v536 = vunpack.c.l.b16 %v468
    %v537 = vunpack.c.l.b16 %v469
    %v538 = vunpack.c.l.b16 %v470
    %v539 = vunpack.c.l.b16 %v471
    %v540 = vunpack.c.l.b16 %v472
    %v541 = vunpack.c.l.b16 %v473
    %v542 = vunpack.c.l.b16 %v474
    %v543 = vunpack.c.l.b16 %v475
    %v544 = vunpack.c.l.b16 %v476
    %v545 = vpack.c.b16 %v514, %v513
    %v546 = vpack.c.b16 %v516, %v515
    %v547 = vpack.c.b16 %v518, %v517
    %v548 = vpack.c.b16 %v520, %v519
    %v549 = vpack.c.b16 %v522, %v521
    %v550 = vpack.c.b16 %v524, %v523
    %v551 = vpack.c.b16 %v526, %v525
    %v552 = vpack.c.b16 %v528, %v527
    %v553 = vpack.c.b16 %v530, %v529
    %v554 = vpack.c.b16 %v532, %v531
    %v555 = vpack.c.b16 %v534, %v533
    %v556 = vpack.c.b16 %v536, %v535
    %v557 = vpack.c.b16 %v538, %v537
    %v558 = vpack.c.b16 %v540, %v539
    %v559 = vpack.c.b16 %v542, %v541
    %v560 = vpack.c.b16 %v544, %v543
    %577 = vmatpush.bf16.msra.mxu0 %v552
    %578 = vmatpush.bf16.msra.mxu0 %v551
    %579 = vmatpush.bf16.msra.mxu0 %v550
    %580 = vmatpush.bf16.msra.mxu0 %v549
    %581 = vmatpush.bf16.msra.mxu0 %v548
    %582 = vmatpush.bf16.msra.mxu0 %v547
    %583 = vmatpush.bf16.msra.mxu0 %v546
    %584 = vmatpush.bf16.msra.mxu0 %v545
    %585 = vmatmul.bf16.gmra.mxu0 %v443
    %v586 = vpop.f32.mrf.mxu0
    %v587 = vadd.f32 %v479, %v586
    %v588 = vpop.f32.mrf.mxu0
    %589 = vdwg.mxu0
    %590 = vmatpush.bf16.msra.mxu0 %v560
    %591 = vmatpush.bf16.msra.mxu0 %v559
    %592 = vmatpush.bf16.msra.mxu0 %v558
    %593 = vmatpush.bf16.msra.mxu0 %v557
    %594 = vmatpush.bf16.msra.mxu0 %v556
    %595 = vmatpush.bf16.msra.mxu0 %v555
    %596 = vmatpush.bf16.msra.mxu0 %v554
    %597 = vmatpush.bf16.msra.mxu0 %v553
    %598 = vmatmul.bf16.gmra.mxu0 %v444
    %v599 = vpop.f32.mrf.mxu0
    %v600 = vadd.f32 %v587, %v599
    %v601 = vpop.f32.mrf.mxu0
    %602 = vdwg.mxu0
    %603 = vst [vmem:[#allocation11] sm:$0xff] %v600
    // Predicated region
    $region50: #{tpu_custom_call.1} parent=1 // pred_check
      _
    $region51: #{tpu_custom_call.1} parent=1 // pred_check_branch
      %605 = sbr.rel (0) target = $region53
    $region52: #{tpu_custom_call.1} parent=1 // pred_region
      %607 = vsyncadd [#allocation4], 0
      %s609 = sshll.u32 [#allocation11], 4
      %s610 = int_to_ptr.vmem [resolvable:$true] %s609
      %s611 = sshll.u32 %s7, 4
      %s612 = int_to_ptr.hbm [resolvable:$true] %s611
      %614 = dma.vmem_to_hbm [thread:$0]  %s610, 128, %s612, [#allocation4]
    $region53: #{tpu_custom_call.1} parent=1 // pred_fallthru
      _
    // Predicated region
    $region54: #{tpu_custom_call.1} parent=1 // pred_check
      _
    $region55: #{tpu_custom_call.1} parent=1 // pred_check_branch
      %616 = sbr.rel (0) target = $region57
    $region56: #{tpu_custom_call.1} parent=1 // pred_region
      %618 = dma.done [#allocation4], 128
    $region57: #{tpu_custom_call.1} parent=1 // pred_fallthru
      _
    %619 = vsyncpa [#allocation3], 1
    %620 = vsyncpa [#allocation6], 1
    %621 = vsyncpa [#allocation9], 1
    %622 = vsyncpa [#allocation4], 1

</llo_original>
